<compile_context>
chip_gen: v7x
topology: tpu7x:2x2x1
jax: 0.10.0
libtpu: 0.0.40
codegen_flags: <defaults>
</compile_context>

<pallas_src>
import functools

import jax
import jax.numpy as jnp
from jax.experimental import pallas as pl
from jax.experimental.pallas import tpu as pltpu

_MIB = 1024 * 1024


# ---------------------------------------------------------------------------
# Generation-aware budgets / tiling
# ---------------------------------------------------------------------------
def _tpu_vmem_capacity_bytes():
    try:
        info = pltpu.get_tpu_info()
        cap = getattr(info, "vmem_capacity_bytes", None)
        if cap:
            return int(cap)
    except Exception:
        pass
    return None


def _num_tensorcores():
    try:
        info = pltpu.get_tpu_info()
        for name in ("num_cores", "core_count", "num_tensorcores",
                     "tensorcore_count"):
            v = getattr(info, name, None)
            if isinstance(v, int) and v > 0:
                return v
    except Exception:
        pass
    return 1


def _vmem_budgets():
    """(scoped vmem limit, per-(double-buffered)-input budget)."""
    cap = _tpu_vmem_capacity_bytes()
    if cap is not None and cap >= 96 * _MIB:
        # v5e / v6e: 128 MiB physical VMEM -> use more of it.
        return 64 * _MIB, 24 * _MIB
    # v7x (64 MiB physical) or unknown generation: leave headroom.
    return 44 * _MIB, 16 * _MIB


def _choose_tiles(B, C, HW, itemsize, per_buffer_budget, num_cores):
    """Jointly pick (c_tile, hw_tile).

    Goals: (1) lane-dense spatial chunks whose contiguous per-(b,c)-row DMA
    segments are >= ~2 KiB (don't collapse hw_tile to 128 when B*C is big);
    (2) >= 2 channel tiles when multiple TensorCores can stream in parallel;
    (3) few grid steps / biggest chunk that fits the per-buffer VMEM budget.
    """
    def hw_tile_for(ct):
        if HW <= 128:
            return HW
        bytes_per_lane = max(B * ct * itemsize, 1)
        if bytes_per_lane * HW <= per_buffer_budget:
            return HW
        lanes = max(per_buffer_budget // bytes_per_lane, 128)
        return int(min((lanes // 128) * 128, (HW // 128) * 128))

    # Candidate channel tiles: full C plus multiple-of-128 divisors (a partial
    # channel tile is the last dim of the [B, C] pooled outputs, so it must be
    # a multiple of 128 unless it is the full axis).
    cands = [C]
    if C % 128 == 0:
        cands += [ct for ct in (1024, 512, 256, 128) if ct < C and C % ct == 0]

    best_key, best = None, (C, hw_tile_for(C))
    for ct in cands:
        ht = hw_tile_for(ct)
        n_steps = (-(-C // ct)) * (-(-HW // ht))
        lane_ok = (ht == HW) or (ht * itemsize >= 2048)
        multi_c = num_cores > 1 and (C // ct) >= 2
        key = (lane_ok, multi_c, -n_steps, ht)
        if best_key is None or key > best_key:
            best_key, best = key, (ct, ht)
    return best


def _make_x_spec(block_shape, index_map, hw_tile, n_h):
    # With many short steps, a 3-deep pipeline hides DMA issue latency that
    # plain double-buffering can expose; with large tiles it only wastes VMEM.
    if hw_tile <= 256 and n_h >= 8:
        try:
            return pl.BlockSpec(block_shape, index_map,
                                pipeline_mode=pl.Buffered(3))
        except TypeError:  # older JAX without pipeline_mode on BlockSpec
            pass
    return pl.BlockSpec(block_shape, index_map)


# ---------------------------------------------------------------------------
# Kernel 1: streaming avg/max pooling over the spatial axis
# ---------------------------------------------------------------------------
def _pool_kernel(x_ref, sum_ref, max_ref, *, hw, hw_tile):
    # x_ref  : [B, c_tile, hw_tile]  current spatial chunk (native dtype)
    # sum_ref: [B, c_tile] f32       running spatial sum (resident output block)
    # max_ref: [B, c_tile] f32       running spatial max (resident output block)
    h = pl.program_id(1)
    n_h = pl.num_programs(1)

    @pl.when(h == 0)
    def _init():
        sum_ref[...] = jnp.zeros_like(sum_ref)
        max_ref[...] = jnp.full_like(max_ref, -jnp.inf)   # f32 accumulator

    x = x_ref[...]                                        # [B, c_tile, hw_tile]

    def _accumulate(x_for_sum, x_for_max):
        # f32 accumulation for the mean; f32 running max (no native -inf).
        sum_ref[...] += jnp.sum(x_for_sum, axis=-1, dtype=jnp.float32)
        max_ref[...] = jnp.maximum(
            max_ref[...], jnp.max(x_for_max, axis=-1).astype(jnp.float32))

    if hw % hw_tile == 0:
        _accumulate(x, x)
    else:
        # Steady-state steps: pure load + reduce, no masking cost.
        @pl.when(h < n_h - 1)
        def _steady():
            _accumulate(x, x)

        # Only the ragged last chunk pays for the iota + selects.
        @pl.when(h == n_h - 1)
        def _tail():
            lane = jax.lax.broadcasted_iota(jnp.int32, x.shape, 2)
            valid = (h * hw_tile + lane) < hw
            if jnp.issubdtype(x.dtype, jnp.floating):
                low = float(jnp.finfo(x.dtype).min)   # dtype-aware sentinel
            else:
                low = int(jnp.iinfo(x.dtype).min)
            x_sum = jnp.where(valid, x, jnp.zeros_like(x))
            x_max = jnp.where(valid, x, jnp.full_like(x, low))
            _accumulate(x_sum, x_max)


# ---------------------------------------------------------------------------
# Kernel 2: tiny fc1 -> relu -> fc2 -> sigmoid epilogue on [B, C] pooled stats
# ---------------------------------------------------------------------------
def _mlp_kernel(sum_ref, max_ref, w1_ref, w2_ref, o_ref, *, inv_hw):
    B = sum_ref.shape[0]
    avg = sum_ref[...] * inv_hw                      # [B, C] f32 (true-HW mean)
    mx = max_ref[...]                                # [B, C] f32
    pooled = jnp.concatenate([avg, mx], axis=0)      # [2B, C] -> one matmul pair

    w1 = w1_ref[...].astype(jnp.float32)             # [C, Ch]
    w2 = w2_ref[...].astype(jnp.float32)             # [Ch, C]

    hid = jnp.maximum(
        jnp.dot(pooled, w1, preferred_element_type=jnp.float32), 0.0)  # [2B, Ch]
    both = jnp.dot(hid, w2, preferred_element_type=jnp.float32)        # [2B, C]
    out = both[:B] + both[B:]                                          # [B, C]
    o_ref[...] = jax.nn.sigmoid(out).astype(o_ref.dtype)


# ---------------------------------------------------------------------------
# Wrapper
# ---------------------------------------------------------------------------
def channel_attention(x_nchw, w_fc1, w_fc2, *, hw_tile=None, c_tile=None):
    """x_nchw: [B, C, H, W]; w_fc1: [C//r, C]; w_fc2: [C, C//r] (PyTorch 1x1
    conv weights with spatial dims squeezed). Returns the sigmoid channel
    attention map of shape [B, C, 1, 1]."""
    B, C, H, W = x_nchw.shape
    HW = H * W
    itemsize = x_nchw.dtype.itemsize

    x_flat = x_nchw.reshape(B, C, HW)      # free reshape (contiguous)
    w1_t = jnp.transpose(w_fc1)            # [C, Ch]
    w2_t = jnp.transpose(w_fc2)            # [Ch, C]

    vmem_limit, per_buffer_budget = _vmem_budgets()
    auto_c, auto_hw = _choose_tiles(B, C, HW, itemsize, per_buffer_budget,
                                    _num_tensorcores())
    if c_tile is None:
        c_tile = auto_c
    if hw_tile is None:
        hw_tile = auto_hw
    c_tile = int(min(c_tile, C))
    hw_tile = int(min(hw_tile, HW))
    # Legality: c_tile must divide C and (unless it is the full axis) be a
    # multiple of 128 since it is the last dim of the [B, C] pooled outputs.
    if c_tile != C and (C % c_tile != 0 or c_tile % 128 != 0):
        c_tile = C
    if hw_tile != HW and hw_tile % 128 != 0:
        hw_tile = HW if HW < 128 else min(max((hw_tile // 128) * 128, 128), HW)

    n_c = C // c_tile
    n_h = pl.cdiv(HW, hw_tile)

    pool_kernel = functools.partial(_pool_kernel, hw=HW, hw_tile=hw_tile)

    # Pure HBM-streaming reduce: advise XLA's scheduler so neighbors overlap.
    pool_cost = pl.CostEstimate(
        flops=2 * B * C * HW,
        transcendentals=0,
        bytes_accessed=B * C * HW * itemsize + 2 * B * C * 4,
    )

    x_spec = _make_x_spec((B, c_tile, hw_tile), lambda ci, h: (0, ci, h),
                          hw_tile, n_h)

    pooled_sum, pooled_max = pl.pallas_call(
        pool_kernel,
        out_shape=(jax.ShapeDtypeStruct((B, C), jnp.float32),
                   jax.ShapeDtypeStruct((B, C), jnp.float32)),
        grid_spec=pltpu.PrefetchScalarGridSpec(
            num_scalar_prefetch=0,
            grid=(n_c, n_h),                       # channels parallel, HW reduce
            in_specs=[x_spec],
            out_specs=[
                pl.BlockSpec((B, c_tile), lambda ci, h: (0, ci)),
                pl.BlockSpec((B, c_tile), lambda ci, h: (0, ci)),
            ],
        ),
        compiler_params=pltpu.CompilerParams(
            dimension_semantics=("parallel", "arbitrary"),
            vmem_limit_bytes=vmem_limit,
        ),
        cost_estimate=pool_cost,
    )(x_flat)

    # Epilogue MLP as a second trivial kernel (everything fits in one block).
    mlp_kernel = functools.partial(_mlp_kernel, inv_hw=1.0 / HW)
    out = pl.pallas_call(
        mlp_kernel,
        out_shape=jax.ShapeDtypeStruct((B, C), x_nchw.dtype),
    )(pooled_sum, pooled_max, w1_t, w2_t)

    return out.reshape(B, C, 1, 1)


def channel_attention_ref(x_nchw, w_fc1, w_fc2):
    """Pure-JAX reference mirroring the PyTorch forward pass."""
    xf = x_nchw.astype(jnp.float32)
    avg = jnp.mean(xf, axis=(2, 3))                     # [B, C]
    mx = jnp.max(xf, axis=(2, 3))                       # [B, C]

    w1 = w_fc1.astype(jnp.float32)
    w2 = w_fc2.astype(jnp.float32)

    def mlp(v):
        h = jnp.maximum(v @ w1.T, 0.0)                  # [B, Ch]
        return h @ w2.T                                 # [B, C]

    out = jax.nn.sigmoid(mlp(avg) + mlp(mx)).astype(x_nchw.dtype)
    return out.reshape(*out.shape, 1, 1)


if __name__ == "__main__":
    key = jax.random.PRNGKey(0)
    kx, k1, k2, kx2 = jax.random.split(key, 4)

    # in_planes=32, ratio=16 -> hidden=2 (matches the module's defaults).
    B, C, H, W = 2, 32, 16, 16
    ratio = 16
    Ch = C // ratio

    x = jax.random.normal(kx, (B, C, H, W), dtype=jnp.float32)
    w_fc1 = jax.random.normal(k1, (Ch, C), dtype=jnp.float32) * (1.0 / jnp.sqrt(C))
    w_fc2 = jax.random.normal(k2, (C, Ch), dtype=jnp.float32) * (1.0 / jnp.sqrt(Ch))

    ref = channel_attention_ref(x, w_fc1, w_fc2)

    # Case 1: force hw_tile=128 so the streaming accumulator path runs >1 step.
    out = jax.block_until_ready(channel_attention(x, w_fc1, w_fc2, hw_tile=128))
    assert out.shape == (B, C, 1, 1), out.shape
    assert jnp.allclose(out, ref, atol=1e-5, rtol=1e-5), (
        f"case1 max abs err = {jnp.max(jnp.abs(out - ref))}")

    # Case 2: ragged spatial extent (18*18 = 324 = 2*128 + 68) exercises the
    # masked last chunk (mask only on the final grid step, true-HW divisor).
    H2, W2 = 18, 18
    x2 = jax.random.normal(kx2, (B, C, H2, W2), dtype=jnp.float32)
    out2 = jax.block_until_ready(channel_attention(x2, w_fc1, w_fc2, hw_tile=128))
    ref2 = channel_attention_ref(x2, w_fc1, w_fc2)
    assert jnp.allclose(out2, ref2, atol=1e-5, rtol=1e-5), (
        f"case2 max abs err = {jnp.max(jnp.abs(out2 - ref2))}")

    # Case 3: fully automatic (generation-aware) tiling.
    out3 = jax.block_until_ready(channel_attention(x, w_fc1, w_fc2))
    assert jnp.allclose(out3, ref, atol=1e-5, rtol=1e-5), (
        f"case3 max abs err = {jnp.max(jnp.abs(out3 - ref))}")

    # Case 4: bf16 ragged input exercises the f32 max accumulator and the
    # dtype-aware (finfo.min) tail sentinel.
    xb = x2.astype(jnp.bfloat16)
    out4 = jax.block_until_ready(channel_attention(xb, w_fc1, w_fc2, hw_tile=128))
    ref4 = channel_attention_ref(xb, w_fc1, w_fc2)
    assert jnp.allclose(out4.astype(jnp.float32), ref4.astype(jnp.float32),
                        atol=2e-2, rtol=2e-2), (
        f"case4 max abs err = "
        f"{jnp.max(jnp.abs(out4.astype(jnp.float32) - ref4.astype(jnp.float32)))}")

    print("KERNEL_OK")
</pallas_src>

<mosaic_0001>
module attributes {stable_mosaic.version = 11 : i64} {
  func.func @_pool_kernel(%arg0: i32, %arg1: i32, %arg2: memref<2x32x128xf32, #tpu.memory_space<vmem>>, %arg3: memref<2x32xf32, #tpu.memory_space<vmem>>, %arg4: memref<2x32xf32, #tpu.memory_space<vmem>>) attributes {dimension_semantics = [#tpu.dimension_semantics<parallel>, #tpu.dimension_semantics<arbitrary>], iteration_bounds = array<i64: 1, 2>, scalar_prefetch = 0 : i64, scratch_operands = 0 : i64, tpu.core_type = #tpu.core_type<tc>, window_params = [{transform_indices = @transform_0, window_bounds = array<i64: 2, 32, 128>}, {transform_indices = @transform_1, window_bounds = array<i64: 2, 32>}, {transform_indices = @transform_2, window_bounds = array<i64: 2, 32>}]} {
    %c0_i32 = arith.constant 0 : i32
    %0 = arith.cmpi eq, %arg1, %c0_i32 : i32
    %1 = arith.extui %0 : i1 to i32
    %c0_i32_0 = arith.constant 0 : i32
    %2 = arith.cmpi ne, %1, %c0_i32_0 : i32
    scf.if %2 {
      %cst_12 = arith.constant 0.000000e+00 : f32
      %12 = vector.broadcast %cst_12 : f32 to vector<2x32xf32>
      %c0_13 = arith.constant 0 : index
      %c0_14 = arith.constant 0 : index
      %13 = vector.load %arg3[%c0_13, %c0_14] : memref<2x32xf32, #tpu.memory_space<vmem>>, vector<2x32xf32>
      tpu.vector_store %arg3[%c0_13, %c0_14], %12 {strides = array<i32>} : memref<2x32xf32, #tpu.memory_space<vmem>>, vector<2x32xf32>,
      %cst_15 = arith.constant 0xFF800000 : f32
      %14 = vector.broadcast %cst_15 : f32 to vector<2x32xf32>
      %c0_16 = arith.constant 0 : index
      %c0_17 = arith.constant 0 : index
      %15 = vector.load %arg4[%c0_16, %c0_17] : memref<2x32xf32, #tpu.memory_space<vmem>>, vector<2x32xf32>
      tpu.vector_store %arg4[%c0_16, %c0_17], %14 {strides = array<i32>} : memref<2x32xf32, #tpu.memory_space<vmem>>, vector<2x32xf32>,
    } else {
    }
    %c0 = arith.constant 0 : index
    %c0_1 = arith.constant 0 : index
    %c0_2 = arith.constant 0 : index
    %3 = vector.load %arg2[%c0, %c0_1, %c0_2] : memref<2x32x128xf32, #tpu.memory_space<vmem>>, vector<2x32x128xf32>
    %c0_3 = arith.constant 0 : index
    %c0_4 = arith.constant 0 : index
    %4 = vector.load %arg3[%c0_3, %c0_4] : memref<2x32xf32, #tpu.memory_space<vmem>>, vector<2x32xf32>
    %cst = arith.constant dense<0.000000e+00> : vector<2x32xf32>
    %5 = vector.multi_reduction <add>, %3, %cst [2] : vector<2x32x128xf32> to vector<2x32xf32>
    %6 = arith.addf %4, %5 : vector<2x32xf32>
    %c0_5 = arith.constant 0 : index
    %c0_6 = arith.constant 0 : index
    %7 = vector.load %arg3[%c0_5, %c0_6] : memref<2x32xf32, #tpu.memory_space<vmem>>, vector<2x32xf32>
    tpu.vector_store %arg3[%c0_5, %c0_6], %6 {strides = array<i32>} : memref<2x32xf32, #tpu.memory_space<vmem>>, vector<2x32xf32>,
    %c0_7 = arith.constant 0 : index
    %c0_8 = arith.constant 0 : index
    %8 = vector.load %arg4[%c0_7, %c0_8] : memref<2x32xf32, #tpu.memory_space<vmem>>, vector<2x32xf32>
    %cst_9 = arith.constant dense<0xFF800000> : vector<2x32xf32>
    %9 = vector.multi_reduction <maximumf>, %3, %cst_9 [2] : vector<2x32x128xf32> to vector<2x32xf32>
    %10 = arith.maximumf %8, %9 : vector<2x32xf32>
    %c0_10 = arith.constant 0 : index
    %c0_11 = arith.constant 0 : index
    %11 = vector.load %arg4[%c0_10, %c0_11] : memref<2x32xf32, #tpu.memory_space<vmem>>, vector<2x32xf32>
    tpu.vector_store %arg4[%c0_10, %c0_11], %10 {strides = array<i32>} : memref<2x32xf32, #tpu.memory_space<vmem>>, vector<2x32xf32>,
    return
  }
  func.func @transform_0(%arg0: i32, %arg1: i32) -> (i32, i32, i32) {
    %c0_i32 = arith.constant 0 : i32
    %c0_i32_0 = arith.constant 0 : i32
    return %c0_i32, %arg0, %arg1 : i32, i32, i32
  }
  func.func @transform_1(%arg0: i32, %arg1: i32) -> (i32, i32) {
    %c0_i32 = arith.constant 0 : i32
    %c0_i32_0 = arith.constant 0 : i32
    return %c0_i32, %arg0 : i32, i32
  }
  func.func @transform_2(%arg0: i32, %arg1: i32) -> (i32, i32) {
    %c0_i32 = arith.constant 0 : i32
    %c0_i32_0 = arith.constant 0 : i32
    return %c0_i32, %arg0 : i32, i32
  }
}

</mosaic_0001>

<llo_original>
// kernel: tpu_custom_call.1
$region0: #{tpu_custom_call.1}
  #allocation0 [shape = 'u32[]', space=smem, size = 0x4, offset = 0x4, fixed_abs, tag = 'smem constant byte address 0x4 - core index']
  #allocation1 [shape = 'u32[144,128]{1,0:T(1,128)}', space=vmem, size = 0x12000, scoped, tag = 'internal scratch']
  %s0 = inlined_call_operand.hbm [shape: f32[2,32,256], index: 0, kind: input, shape index: {}]
  %s1 = inlined_call_operand.hbm [shape: f32[2,32], index: 1, kind: output, shape index: {0}]
  %s2 = inlined_call_operand.hbm [shape: f32[2,32], index: 2, kind: output, shape index: {1}]
  %3 = xla_tuple %s1, %s2
  %s4 = sld [smem:[#allocation0]]
  $region53: #{tpu_custom_call.1} parent=0
    _
  %s6 = ssub.s32 1, %s4
  %s7 = scalar_select 0, %s6, %s4
  $region1: #{tpu_custom_call.1} parent=0
    #allocation2 [shape = 'u8[65536]{0}', space=vmem, size = 0x10000, scoped, tag = 'input window, operand 0']
    #allocation3 [shape = 's32[2]{0}', space=sflag, size = 0x8, scoped, tag = 'scoped memory for tpu_custom_call.1']
    #allocation4 [shape = 's32[2]{0}', space=sflag, size = 0x8, scoped, tag = 'scoped memory for tpu_custom_call.1']
    #allocation5 [shape = 'u8[1024]{0}', space=vmem, size = 0x400, scoped, tag = 'output window, operand 0, single buffered']
    #allocation6 [shape = 'u8[1024]{0}', space=vmem, size = 0x400, scoped, tag = 'output window, operand 1, single buffered']
    #allocation7 [shape = 's32[1]{0}', space=sflag, size = 0x4, scoped, tag = 'scoped memory for tpu_custom_call.1']
    %8 = vsyncpa [#allocation3], 0
    %s9 = scalar_lea.sflag [#allocation3], 1
    %10 = vsyncpa %s9, 0
    %11 = vsyncpa [#allocation4], 0
    %12 = vsyncpa [#allocation7], 0
    loop: start=0, step=1, limit=4
    $region2: #{tpu_custom_call.1} parent=1 // loop_pre_header
      _
    $region3: #{tpu_custom_call.1} parent=1 // loop_header
      %s14 = sphi 0, %s18
      %p15 = scmp.ge.s32.totalorder %s14, 4
      %s21 = sphi 0, %s33
      %s22 = sphi 0, %s29
      %s23 = sphi 0, %s21
      %s24 = sphi 0, %s22
      %s25 = sphi 0, %s23
      %s26 = sphi 0, %s24
      %s38 = sphi 0, %s40
      %s41 = sphi 0, %s38
      %s42 = sphi 0, %s41
      %s58 = sphi 0, %s42
      %s64 = sphi 0, %s66
      %s67 = sphi 0, %s64
      %s68 = sphi 0, %s67
      %s84 = sphi 0, %s68
      %s90 = sphi 0, %s92
      %s93 = sphi 0, %s90
      %s94 = sphi 0, %s93
      %s110 = sphi 0, %s94
    $region4: #{tpu_custom_call.1} parent=1 // loop_header_branch
      %17 = sbr.rel (%p15) target = $region8
    $region5: #{tpu_custom_call.1} parent=1 // loop_body
      %s19 = ssub.s32 %s14, 1
      %s20 = ssub.s32 %s14, 2
      %s27 = sadd.s32 1, %s22
      %p28 = scmp.ge.s32.totalorder %s27, 2
      %s29 = scalar_select %p28, 0, %s27
      %s30 = sadd.s32 1, %s21
      %s31 = scalar_select %p28, %s30, %s21
      %p32 = scmp.ge.s32.totalorder %s31, 1
      %s33 = scalar_select %p32, 0, %s31
      %s34 = ssub.s32 %s21, %s33
      %s35 = ssub.s32 %s22, %s29
      %s36 = sor.u32 %s34, %s35
      %p37 = scmp.eq.s32.totalorder %s36, 0
      %s39 = sadd.s32 %s38, 1
      %s40 = scalar_select %p37, %s38, %s39
      %p43 = pneg %p37
      %p44 = scmp.eq.s32.totalorder %s14, 1
      %p45 = por %p43, %p44
      %p46 = scmp.ne.s32.totalorder %s38, %s41
      %p47 = scmp.eq.s32.totalorder %s14, 0
      %p48 = por %p46, %p47
      %p49 = scmp.ne.s32.totalorder %s38, %s41
      %p50 = scmp.eq.s32.totalorder %s19, 1
      %p51 = por %p49, %p50
      %p52 = scmp.ne.s32.totalorder %s41, %s42
      %p53 = scmp.eq.s32.totalorder %s19, 0
      %p54 = por %p52, %p53
      %p55 = scmp.ne.s32.totalorder %s41, %s42
      %p56 = scmp.eq.s32.totalorder %s20, 1
      %p57 = por %p55, %p56
      %p59 = scmp.ne.s32.totalorder %s42, %s58
      %p60 = scmp.eq.s32.totalorder %s20, 0
      %p61 = por %p59, %p60
      %s62 = ssub.s32 %s21, %s33
      %p63 = scmp.eq.s32.totalorder %s62, 0
      %s65 = sadd.s32 %s64, 1
      %s66 = scalar_select %p63, %s64, %s65
      %p69 = pneg %p63
      %p70 = scmp.eq.s32.totalorder %s14, 1
      %p71 = por %p69, %p70
      %p72 = scmp.ne.s32.totalorder %s64, %s67
      %p73 = scmp.eq.s32.totalorder %s14, 0
      %p74 = por %p72, %p73
      %p75 = scmp.ne.s32.totalorder %s64, %s67
      %p76 = scmp.eq.s32.totalorder %s19, 1
      %p77 = por %p75, %p76
      %p78 = scmp.ne.s32.totalorder %s67, %s68
      %p79 = scmp.eq.s32.totalorder %s19, 0
      %p80 = por %p78, %p79
      %p81 = scmp.ne.s32.totalorder %s67, %s68
      %p82 = scmp.eq.s32.totalorder %s20, 1
      %p83 = por %p81, %p82
      %p85 = scmp.ne.s32.totalorder %s68, %s84
      %p86 = scmp.eq.s32.totalorder %s20, 0
      %p87 = por %p85, %p86
      %s88 = ssub.s32 %s21, %s33
      %p89 = scmp.eq.s32.totalorder %s88, 0
      %s91 = sadd.s32 %s90, 1
      %s92 = scalar_select %p89, %s90, %s91
      %p95 = pneg %p89
      %p96 = scmp.eq.s32.totalorder %s14, 1
      %p97 = por %p95, %p96
      %p98 = scmp.ne.s32.totalorder %s90, %s93
      %p99 = scmp.eq.s32.totalorder %s14, 0
      %p100 = por %p98, %p99
      %p101 = scmp.ne.s32.totalorder %s90, %s93
      %p102 = scmp.eq.s32.totalorder %s19, 1
      %p103 = por %p101, %p102
      %p104 = scmp.ne.s32.totalorder %s93, %s94
      %p105 = scmp.eq.s32.totalorder %s19, 0
      %p106 = por %p104, %p105
      %p107 = scmp.ne.s32.totalorder %s93, %s94
      %p108 = scmp.eq.s32.totalorder %s20, 1
      %p109 = por %p107, %p108
      %p111 = scmp.ne.s32.totalorder %s94, %s110
      %p112 = scmp.eq.s32.totalorder %s20, 0
      %p113 = por %p111, %p112
      %p114 = scmp.le.s32.totalorder 1, %s14
      %p115 = scmp.lt.s32.totalorder %s14, 3
      %p116 = pnand %p114, %p115
      %p117 = pneg %p116
      // Predicated region
      $region9: #{tpu_custom_call.1} parent=5 // pred_check
        _
      $region10: #{tpu_custom_call.1} parent=5 // pred_check_branch
        %119 = sbr.rel (%p116) target = $region12
      $region11: #{tpu_custom_call.1} parent=5 // pred_region
        %s120 = ssub.s32 %s14, 1
      $region12: #{tpu_custom_call.1} parent=5 // pred_fallthru
        _
      %p121 = scmp.lt.s32.totalorder %s14, 2
      // Predicated region
      $region13: #{tpu_custom_call.1} parent=5 // pred_check
        %p122 = pneg %p121
      $region14: #{tpu_custom_call.1} parent=5 // pred_check_branch
        %124 = sbr.rel (%p122) target = $region16
      $region15: #{tpu_custom_call.1} parent=5 // pred_region
        // Predicated region
        $region17: #{tpu_custom_call.1} parent=15 // pred_check
          %p125 = pneg %p48
        $region18: #{tpu_custom_call.1} parent=15 // pred_check_branch
          %127 = sbr.rel (%p125) target = $region20
        $region19: #{tpu_custom_call.1} parent=15 // pred_region
          %s128 = sand.u32 %s38, 1
          %s129 = scalar_lea.sflag [#allocation3], %s128
          %s130 = sand.u32 %s38, 1
          %s131 = smul.addr %s130, 64
          %s132 = scalar_lea.vmem [#allocation2], %s131
          %s133 = smul.u32 4, %s21
          %s135 = ssub.s32 1024, 1024
          %136 = vsyncadd %s129, %s135
          %s137 = smul.addr %s133, 2
          %s138 = sadd.s32 %s22, %s137
          %s139 = smul.addr %s138, 128
          %s140 = scalar_lea.hbm %s0, %s139
          %s141 = sshll.u32 %s132, 4
          %s142 = int_to_ptr.vmem [resolvable:$true] %s141
          %147 = dma.hbm_to_vmem [thread:$0]  %s140, 1024, %s142, %s129, 256, 128, 8
        $region20: #{tpu_custom_call.1} parent=15 // pred_fallthru
          _
      $region16: #{tpu_custom_call.1} parent=5 // pred_fallthru
        _
      %p148 = scmp.le.s32.totalorder 1, %s14
      %p149 = scmp.lt.s32.totalorder %s14, 3
      %p150 = pnand %p148, %p149
      %p151 = pneg %p150
      // Predicated region
      $region21: #{tpu_custom_call.1} parent=5 // pred_check
        _
      $region22: #{tpu_custom_call.1} parent=5 // pred_check_branch
        %153 = sbr.rel (%p150) target = $region24
      $region23: #{tpu_custom_call.1} parent=5 // pred_region
        %s154 = ssub.s32 %s14, 1
        %s155 = sand.u32 %s41, 1
        %s156 = scalar_lea.sflag [#allocation3], %s155
        %s157 = sand.u32 %s41, 1
        %s158 = smul.addr %s157, 64
        %s159 = scalar_lea.vmem [#allocation2], %s158
        // Predicated region
        $region25: #{tpu_custom_call.1} parent=23 // pred_check
          %p160 = pneg %p54
        $region26: #{tpu_custom_call.1} parent=23 // pred_check_branch
          %162 = sbr.rel (%p160) target = $region28
        $region27: #{tpu_custom_call.1} parent=23 // pred_region
          %163 = dma.done %s156, 1024
        $region28: #{tpu_custom_call.1} parent=23 // pred_fallthru
          _
        %s164 = sand.u32 %s41, 1
        %s165 = scalar_lea.sflag [#allocation3], %s164
        %s166 = sand.u32 %s41, 1
        %s167 = smul.addr %s166, 64
        %s168 = scalar_lea.vmem [#allocation2], %s167
        %p169 = pneg %p54
        %p170 = pneg %p51
        %p171 = pneg %p80
        %p172 = pneg %p77
        %p173 = pneg %p106
        %p174 = pneg %p103
        %s175 = smul.u32 4, %s23
        %p176 = scmp.eq.s32.totalorder %s24, 0
        // Predicated region
        $region29: #{tpu_custom_call.1} parent=23 // pred_check
          %p177 = pneg %p176
        $region30: #{tpu_custom_call.1} parent=23 // pred_check_branch
          %179 = sbr.rel (%p177) target = $region32
        $region31: #{tpu_custom_call.1} parent=23 // pred_region
          %vm180 = vcmask 254976
          %181 = vst.msk [vmem:[#allocation5] sm:$0x3] %vm180, 0.0
          %182 = vst.msk [vmem:[#allocation6] sm:$0x3] %vm180, -inf
        $region32: #{tpu_custom_call.1} parent=23 // pred_fallthru
          _
        %v183 = vld [vmem:[%s159] sm:$0xff]
        %v184 = vld [vmem:[%s159 + $0x8] sm:$0xff]
        %v185 = vld [vmem:[%s159 + $0x10] sm:$0xff]
        %v186 = vld [vmem:[%s159 + $0x18] sm:$0xff]
        %v187 = vld [vmem:[%s159 + $0x20] sm:$0xff]
        %v188 = vld [vmem:[%s159 + $0x28] sm:$0xff]
        %v189 = vld [vmem:[%s159 + $0x30] sm:$0xff]
        %v190 = vld [vmem:[%s159 + $0x38] sm:$0xff]
        %v191 = vld [vmem:[#allocation5] sm:$0x3]
        %192 = vadd.xlane.f32.xlu0 %v183
        %v193 = vpop.xlane.xlu0 %192
        %194 = vadd.xlane.f32.xlu0 %v184
        %v195 = vpop.xlane.xlu0 %194
        %196 = vadd.xlane.f32.xlu0 %v185
        %v197 = vpop.xlane.xlu0 %196
        %198 = vadd.xlane.f32.xlu0 %v186
        %v199 = vpop.xlane.xlu0 %198
        %200 = vadd.xlane.f32.xlu0 %v187
        %v201 = vpop.xlane.xlu0 %200
        %202 = vadd.xlane.f32.xlu0 %v188
        %v203 = vpop.xlane.xlu0 %202
        %204 = vadd.xlane.f32.xlu0 %v189
        %v205 = vpop.xlane.xlu0 %204
        %206 = vadd.xlane.f32.xlu0 %v190
        %v207 = vpop.xlane.xlu0 %206
        %v216 = vlaneseq
        %v217 = vand.u32 %v216, 127
        %v218 = vlaneseq
        %v219 = vshrl.u32 %v218, 7
        %v220 = vsub.s32 %v217, %v219
        %v221 = vrot.slane %v193, %v220
        %v222 = vadd.s32 %v217, 4294967288
        %v223 = vlaneseq
        %v224 = vshrl.u32 %v223, 7
        %v225 = vsub.s32 %v222, %v224
        %v226 = vrot.slane %v195, %v225
        %vm227 = vcmask 130112
        %v228 = vsel %vm227, %v226, %v221
        %v229 = vadd.s32 %v217, 4294967280
        %v230 = vlaneseq
        %v231 = vshrl.u32 %v230, 7
        %v232 = vsub.s32 %v229, %v231
        %v233 = vrot.slane %v197, %v232
        %vm234 = vcmask 195712
        %v235 = vsel %vm234, %v233, %v228
        %v236 = vadd.s32 %v217, 4294967272
        %v237 = vlaneseq
        %v238 = vshrl.u32 %v237, 7
        %v239 = vsub.s32 %v236, %v238
        %v240 = vrot.slane %v199, %v239
        %vm241 = vcmask 261312
        %v242 = vsel %vm241, %v240, %v235
        %v243 = vlaneseq
        %v244 = vshrl.u32 %v243, 7
        %v245 = vsub.s32 %v217, %v244
        %v246 = vrot.slane %v201, %v245
        %v247 = vlaneseq
        %v248 = vshrl.u32 %v247, 7
        %v249 = vsub.s32 %v222, %v248
        %v250 = vrot.slane %v203, %v249
        %v251 = vsel %vm227, %v250, %v246
        %v252 = vlaneseq
        %v253 = vshrl.u32 %v252, 7
        %v254 = vsub.s32 %v229, %v253
        %v255 = vrot.slane %v205, %v254
        %v256 = vsel %vm234, %v255, %v251
        %v257 = vlaneseq
        %v258 = vshrl.u32 %v257, 7
        %v259 = vsub.s32 %v236, %v258
        %v260 = vrot.slane %v207, %v259
        %v261 = vsel %vm241, %v260, %v256
        %vm262 = vcmask 1041409
        %v263 = vsel %vm262, %v261, %v242
        %v265 = vadd.f32 %v191, %v263
        %vm266 = vcmask 254976
        %267 = vst.msk [vmem:[#allocation5] sm:$0x3] %vm266, %v265
        %v268 = vld [vmem:[#allocation6] sm:$0x3]
        %269 = vmax.xlane.f32.xlu0 %v183
        %v270 = vpop.xlane.xlu0 %269
        %271 = vmax.xlane.f32.xlu0 %v184
        %v272 = vpop.xlane.xlu0 %271
        %273 = vmax.xlane.f32.xlu0 %v185
        %v274 = vpop.xlane.xlu0 %273
        %275 = vmax.xlane.f32.xlu0 %v186
        %v276 = vpop.xlane.xlu0 %275
        %277 = vmax.xlane.f32.xlu0 %v187
        %v278 = vpop.xlane.xlu0 %277
        %279 = vmax.xlane.f32.xlu0 %v188
        %v280 = vpop.xlane.xlu0 %279
        %281 = vmax.xlane.f32.xlu0 %v189
        %v282 = vpop.xlane.xlu0 %281
        %283 = vmax.xlane.f32.xlu0 %v190
        %v284 = vpop.xlane.xlu0 %283
        %v293 = vlaneseq
        %v294 = vshrl.u32 %v293, 7
        %v295 = vsub.s32 %v217, %v294
        %v296 = vrot.slane %v270, %v295
        %v297 = vlaneseq
        %v298 = vshrl.u32 %v297, 7
        %v299 = vsub.s32 %v222, %v298
        %v300 = vrot.slane %v272, %v299
        %v301 = vsel %vm227, %v300, %v296
        %v302 = vlaneseq
        %v303 = vshrl.u32 %v302, 7
        %v304 = vsub.s32 %v229, %v303
        %v305 = vrot.slane %v274, %v304
        %v306 = vsel %vm234, %v305, %v301
        %v307 = vlaneseq
        %v308 = vshrl.u32 %v307, 7
        %v309 = vsub.s32 %v236, %v308
        %v310 = vrot.slane %v276, %v309
        %v311 = vsel %vm241, %v310, %v306
        %v312 = vlaneseq
        %v313 = vshrl.u32 %v312, 7
        %v314 = vsub.s32 %v217, %v313
        %v315 = vrot.slane %v278, %v314
        %v316 = vlaneseq
        %v317 = vshrl.u32 %v316, 7
        %v318 = vsub.s32 %v222, %v317
        %v319 = vrot.slane %v280, %v318
        %v320 = vsel %vm227, %v319, %v315
        %v321 = vlaneseq
        %v322 = vshrl.u32 %v321, 7
        %v323 = vsub.s32 %v229, %v322
        %v324 = vrot.slane %v282, %v323
        %v325 = vsel %vm234, %v324, %v320
        %v326 = vlaneseq
        %v327 = vshrl.u32 %v326, 7
        %v328 = vsub.s32 %v236, %v327
        %v329 = vrot.slane %v284, %v328
        %v330 = vsel %vm241, %v329, %v325
        %v331 = vsel %vm262, %v330, %v311
        %v333 = vmax.f32 %v268, %v331
        %334 = vst.msk [vmem:[#allocation6] sm:$0x3] %vm266, %v333
        // Predicated region
        $region33: #{tpu_custom_call.1} parent=23 // pred_check
          %p335 = pneg %p77
        $region34: #{tpu_custom_call.1} parent=23 // pred_check_branch
          %337 = sbr.rel (%p335) target = $region36
        $region35: #{tpu_custom_call.1} parent=23 // pred_region
          %s339 = ssub.s32 32, 32
          %340 = vsyncadd [#allocation4], %s339
          %s341 = smul.addr %s23, 32
          %s342 = scalar_lea.hbm %s1, %s341
          %s344 = sshll.u32 [#allocation5], 4
          %s345 = int_to_ptr.vmem [resolvable:$true] %s344
          %347 = dma.vmem_to_hbm [thread:$0]  %s345, 32, %s342, [#allocation4]
        $region36: #{tpu_custom_call.1} parent=23 // pred_fallthru
          _
        // Predicated region
        $region37: #{tpu_custom_call.1} parent=23 // pred_check
          %p348 = pneg %p103
        $region38: #{tpu_custom_call.1} parent=23 // pred_check_branch
          %350 = sbr.rel (%p348) target = $region40
        $region39: #{tpu_custom_call.1} parent=23 // pred_region
          %s352 = ssub.s32 32, 32
          %353 = vsyncadd [#allocation7], %s352
          %s354 = smul.addr %s23, 32
          %s355 = scalar_lea.hbm %s2, %s354
          %s357 = sshll.u32 [#allocation6], 4
          %s358 = int_to_ptr.vmem [resolvable:$true] %s357
          %360 = dma.vmem_to_hbm [thread:$0]  %s358, 32, %s355, [#allocation7]
        $region40: #{tpu_custom_call.1} parent=23 // pred_fallthru
          _
        // Predicated region
        $region41: #{tpu_custom_call.1} parent=23 // pred_check
          %p361 = pneg %p77
        $region42: #{tpu_custom_call.1} parent=23 // pred_check_branch
          %363 = sbr.rel (%p361) target = $region44
        $region43: #{tpu_custom_call.1} parent=23 // pred_region
          %364 = dma.done [#allocation4], 32
        $region44: #{tpu_custom_call.1} parent=23 // pred_fallthru
          _
        // Predicated region
        $region45: #{tpu_custom_call.1} parent=23 // pred_check
          %p365 = pneg %p103
        $region46: #{tpu_custom_call.1} parent=23 // pred_check_branch
          %367 = sbr.rel (%p365) target = $region48
        $region47: #{tpu_custom_call.1} parent=23 // pred_region
          %368 = dma.done [#allocation7], 32
        $region48: #{tpu_custom_call.1} parent=23 // pred_fallthru
          _
      $region24: #{tpu_custom_call.1} parent=5 // pred_fallthru
        _
      %p369 = scmp.le.s32.totalorder 2, %s14
      // Predicated region
      $region49: #{tpu_custom_call.1} parent=5 // pred_check
        %p370 = pneg %p369
      $region50: #{tpu_custom_call.1} parent=5 // pred_check_branch
        %372 = sbr.rel (%p370) target = $region52
      $region51: #{tpu_custom_call.1} parent=5 // pred_region
        %s373 = ssub.s32 %s14, 2
      $region52: #{tpu_custom_call.1} parent=5 // pred_fallthru
        _
    $region6: #{tpu_custom_call.1} parent=1 // loop_footer
      %s18 = sadd.s32 1, %s14
    $region7: #{tpu_custom_call.1} parent=1 // loop_footer_branch
      %13 = sbr.rel target = $region3
    $region8: #{tpu_custom_call.1} parent=1 // loop_exit
      _
    %374 = vsyncpa [#allocation3], 1
    %s375 = scalar_lea.sflag [#allocation3], 1
    %376 = vsyncpa %s375, 1
    %377 = vsyncpa [#allocation4], 1
    %s378 = scalar_lea.sflag [#allocation4], 1
    %379 = vsyncpa %s378, 1
    %380 = vsyncpa [#allocation7], 1

</llo_original>
